<compile_context>
chip_gen: v6e
topology: v6e:2x2x1
jax: 0.10.0
libtpu: 0.0.40
codegen_flags: <defaults>
</compile_context>

<pallas_src>
import jax
import jax.numpy as jnp
from jax.experimental import pallas as pl
from jax.experimental.pallas import tpu as pltpu


def _round_up(x, m):
    return ((x + m - 1) // m) * m


# Below this many rows per tile, splitting for the v7x 2-TC "parallel" axis
# would push us back into per-grid-step-overhead territory.
_MIN_SPLIT_ROWS = 2048


def _choose_batch_tile(B, batch_tile):
    """Pick (tile_rows, num_tiles): tile is a multiple of 16 (bf16 sublane
    packing), 128-aligned when there is more than one tile (keeps the (1, tb)
    lane-dense output block 128-aligned), and the tile count is even on large
    batches so v7x's two TensorCores are both fed."""
    cap = max(16, _round_up(batch_tile, 16))
    num_tiles = max(1, pl.cdiv(B, cap))
    if B >= 2 * _MIN_SPLIT_ROWS:
        if num_tiles < 2:
            num_tiles = 2
        if num_tiles % 2:
            num_tiles += 1
    if num_tiles == 1:
        tb = max(16, _round_up(B, 16))
    else:
        tb = max(128, _round_up(pl.cdiv(B, num_tiles), 128))
        num_tiles = pl.cdiv(B, tb)
    return tb, num_tiles


def value_net_kernel(x_ref, w1_ref, b1_ref, w2_ref, b2_ref, w3_ref, b3_ref,
                     o_ref):
    # fc1 + relu: cast the f32 state tile to bf16 in-kernel (hides under the
    # input DMA); MXU matmul with f32 accumulation, bias/ReLU in f32.
    x = x_ref[...].astype(jnp.bfloat16)
    h1 = jnp.dot(x, w1_ref[...], preferred_element_type=jnp.float32)
    h1 = jnp.maximum(h1 + b1_ref[...], 0.0)

    # fc2 + relu: activations back to bf16 for the MXU, keep the f32 acc.
    h2 = jnp.dot(h1.astype(jnp.bfloat16), w2_ref[...],
                 preferred_element_type=jnp.float32)
    h2 = jnp.maximum(h2 + b2_ref[...], 0.0)

    # fc3 (out_features = 1): contract w3 (1, H) against the hidden dim of
    # h2 (tb, H) -> (1, tb).  Same "A @ B^T" contraction used for q@k^T in
    # attention kernels; the result is already a lane-dense row, so the store
    # path avoids (tb, 1) masked lane-width-1 stores entirely.
    v = jax.lax.dot_general(
        w3_ref[...], h2.astype(jnp.bfloat16),
        dimension_numbers=(((1,), (1,)), ((), ())),
        preferred_element_type=jnp.float32)
    o_ref[...] = (v + b3_ref[...]).astype(o_ref.dtype)


def value_network_forward(state, prep, *, batch_tile=8192):
    """state: (B, state_size) f32.  prep: prepare_params(...) output."""
    w1, b1, w2, b2, w3, b3 = (prep["w1"], prep["b1"], prep["w2"], prep["b2"],
                              prep["w3"], prep["b3"])
    B, state_size = state.shape
    hidden = w1.shape[1]

    tb, num_tiles = _choose_batch_tile(B, batch_tile)
    Bp = num_tiles * tb

    x = state
    if Bp != B:
        # Pad only when needed; padded rows are computed and sliced off below.
        x = jnp.pad(x, ((0, Bp - B), (0, 0)))

    flops = 2 * Bp * (state_size * hidden + hidden * hidden + hidden)
    bytes_accessed = (Bp * state_size * 4            # f32 state read
                      + w1.size * 2 + w2.size * 2 + w3.size * 2
                      + b1.size * 4 + b2.size * 4 + b3.size * 4
                      + Bp * 4)                      # f32 value write

    out = pl.pallas_call(
        value_net_kernel,
        out_shape=jax.ShapeDtypeStruct((1, Bp), jnp.float32),
        grid=(num_tiles,),
        in_specs=[
            # state: f32, tiled over the batch grid axis (cast in-kernel)
            pl.BlockSpec((tb, state_size), lambda i: (i, 0)),
            # weights/biases: constant block index -> fetched once, VMEM-resident
            pl.BlockSpec((state_size, hidden), lambda i: (0, 0)),
            pl.BlockSpec((1, hidden), lambda i: (0, 0)),
            pl.BlockSpec((hidden, hidden), lambda i: (0, 0)),
            pl.BlockSpec((1, hidden), lambda i: (0, 0)),
            pl.BlockSpec((1, hidden), lambda i: (0, 0)),
            pl.BlockSpec((1, 1), lambda i: (0, 0)),
        ],
        # lane-dense output: each grid step writes a contiguous (1, tb) row slab
        out_specs=pl.BlockSpec((1, tb), lambda i: (0, i)),
        compiler_params=pltpu.CompilerParams(
            dimension_semantics=("parallel",)),
        cost_estimate=pl.CostEstimate(flops=flops, transcendentals=0,
                                      bytes_accessed=bytes_accessed),
    )(x, w1, b1, w2, b2, w3, b3)

    # (1, Bp) lane-dense result -> (B, 1) column expected by the module.
    return out.reshape(-1)[:B].reshape(B, 1)


def init_params(key, state_size, hidden=64):
    """Deterministic init mimicking nn.Linear default (U[-1/sqrt(fan_in), +])."""
    ks = jax.random.split(key, 6)

    def linear(kw, kb, fan_in, fan_out):
        bound = 1.0 / jnp.sqrt(jnp.float32(fan_in))
        # stored as (in, out) so the kernel does x @ W
        w = jax.random.uniform(kw, (fan_in, fan_out), jnp.float32, -bound, bound)
        b = jax.random.uniform(kb, (1, fan_out), jnp.float32, -bound, bound)
        return w, b

    w1, b1 = linear(ks[0], ks[1], state_size, hidden)
    w2, b2 = linear(ks[2], ks[3], hidden, hidden)
    w3, b3 = linear(ks[4], ks[5], hidden, 1)
    return {"w1": w1, "b1": b1, "w2": w2, "b2": b2, "w3": w3, "b3": b3}


def prepare_params(params):
    """One-time conversion to the kernel layout (hoisted out of the hot path):
    bf16 weights for the MXU, w3 as a (1, hidden) bf16 row, f32 biases."""
    hidden = params["w1"].shape[1]
    return {
        "w1": params["w1"].astype(jnp.bfloat16),                     # (S, H)
        "b1": params["b1"].reshape(1, hidden).astype(jnp.float32),   # (1, H)
        "w2": params["w2"].astype(jnp.bfloat16),                     # (H, H)
        "b2": params["b2"].reshape(1, hidden).astype(jnp.float32),   # (1, H)
        "w3": params["w3"].reshape(1, hidden).astype(jnp.bfloat16),  # (1, H)
        "b3": params["b3"].reshape(1, 1).astype(jnp.float32),        # (1, 1)
    }


def reference_forward(state, p):
    """Pure-JAX reference matching the kernel numerics (bf16 operands,
    f32 accumulation / bias / ReLU)."""
    bf, f32 = jnp.bfloat16, jnp.float32
    hi = jax.lax.Precision.HIGHEST
    x = state.astype(bf).astype(f32)
    w1 = p["w1"].astype(bf).astype(f32)
    w2 = p["w2"].astype(bf).astype(f32)
    w3 = p["w3"].astype(bf).astype(f32)
    h1 = jnp.maximum(jnp.dot(x, w1, precision=hi) + p["b1"], 0.0)
    h1 = h1.astype(bf).astype(f32)
    h2 = jnp.maximum(jnp.dot(h1, w2, precision=hi) + p["b2"], 0.0)
    h2 = h2.astype(bf).astype(f32)
    v = jnp.dot(h2, w3.reshape(-1, 1), precision=hi)
    return v + p["b3"]


if __name__ == "__main__":
    key = jax.random.PRNGKey(0)
    k_param, k_state = jax.random.split(key)

    state_size = 32
    params = init_params(k_param, state_size)
    prep = prepare_params(params)   # hoisted weight prep: done once

    # 1) Small batch (single grid step, block == full array).
    batch = 8
    state = jax.random.normal(k_state, (batch, state_size), jnp.float32)
    value = jax.block_until_ready(value_network_forward(state, prep))
    ref = reference_forward(state, params)
    assert value.shape == (batch, 1)
    assert jnp.allclose(value, ref, atol=1e-3, rtol=1e-3), \
        float(jnp.max(jnp.abs(value - ref)))

    # 2) Batch that is not a tile multiple with a small tile cap: exercises
    #    padding + multi-tile grid + lane-dense writeback across tiles.
    batch2 = 300
    state2 = jax.random.normal(jax.random.PRNGKey(1), (batch2, state_size),
                               jnp.float32)
    value2 = jax.block_until_ready(
        value_network_forward(state2, prep, batch_tile=128))
    ref2 = reference_forward(state2, params)
    assert value2.shape == (batch2, 1)
    assert jnp.allclose(value2, ref2, atol=1e-3, rtol=1e-3), \
        float(jnp.max(jnp.abs(value2 - ref2)))

    print("KERNEL_OK")
</pallas_src>

<mosaic_0001>
module attributes {stable_mosaic.version = 11 : i64} {
  func.func @value_net_kernel(%arg0: i32, %arg1: memref<16x32xf32, #tpu.memory_space<vmem>>, %arg2: memref<32x64xbf16, #tpu.memory_space<vmem>>, %arg3: memref<1x64xf32, #tpu.memory_space<vmem>>, %arg4: memref<64x64xbf16, #tpu.memory_space<vmem>>, %arg5: memref<1x64xf32, #tpu.memory_space<vmem>>, %arg6: memref<1x64xbf16, #tpu.memory_space<vmem>>, %arg7: memref<1x1xf32, #tpu.memory_space<vmem>>, %arg8: memref<1x16xf32, #tpu.memory_space<vmem>>) attributes {dimension_semantics = [#tpu.dimension_semantics<parallel>], iteration_bounds = array<i64: 1>, scalar_prefetch = 0 : i64, scratch_operands = 0 : i64, tpu.core_type = #tpu.core_type<tc>, window_params = [{transform_indices = @transform_0, window_bounds = array<i64: 16, 32>}, {pipeline_mode = #tpu.pipeline_mode<synchronous>, transform_indices = @transform_1, window_bounds = array<i64: 32, 64>}, {pipeline_mode = #tpu.pipeline_mode<synchronous>, transform_indices = @transform_2, window_bounds = array<i64: 1, 64>}, {pipeline_mode = #tpu.pipeline_mode<synchronous>, transform_indices = @transform_3, window_bounds = array<i64: 64, 64>}, {pipeline_mode = #tpu.pipeline_mode<synchronous>, transform_indices = @transform_4, window_bounds = array<i64: 1, 64>}, {pipeline_mode = #tpu.pipeline_mode<synchronous>, transform_indices = @transform_5, window_bounds = array<i64: 1, 64>}, {pipeline_mode = #tpu.pipeline_mode<synchronous>, transform_indices = @transform_6, window_bounds = array<i64: 1, 1>}, {transform_indices = @transform_7, window_bounds = array<i64: 1, 16>}]} {
    %c0 = arith.constant 0 : index
    %c0_0 = arith.constant 0 : index
    %0 = vector.load %arg1[%c0, %c0_0] : memref<16x32xf32, #tpu.memory_space<vmem>>, vector<16x32xf32>
    %1 = arith.truncf %0 : vector<16x32xf32> to vector<16x32xbf16>
    %c0_1 = arith.constant 0 : index
    %c0_2 = arith.constant 0 : index
    %2 = vector.load %arg2[%c0_1, %c0_2] : memref<32x64xbf16, #tpu.memory_space<vmem>>, vector<32x64xbf16>
    %cst = arith.constant dense<0.000000e+00> : vector<16x64xf32>
    %3 = tpu.matmul %1, %2, %cst {dimension_numbers = #tpu.dot_dimension_numbers<[1], [0], [0], [1], [0, 0, 1, 1], [], []>} : vector<16x32xbf16>, vector<32x64xbf16>, vector<16x64xf32> -> vector<16x64xf32>
    %c0_3 = arith.constant 0 : index
    %c0_4 = arith.constant 0 : index
    %4 = vector.load %arg3[%c0_3, %c0_4] : memref<1x64xf32, #tpu.memory_space<vmem>>, vector<1x64xf32>
    %5 = vector.broadcast %4 : vector<1x64xf32> to vector<16x64xf32>
    %6 = arith.addf %3, %5 : vector<16x64xf32>
    %cst_5 = arith.constant 0.000000e+00 : f32
    %7 = vector.broadcast %cst_5 : f32 to vector<16x64xf32>
    %8 = arith.maximumf %6, %7 : vector<16x64xf32>
    %9 = arith.truncf %8 : vector<16x64xf32> to vector<16x64xbf16>
    %c0_6 = arith.constant 0 : index
    %c0_7 = arith.constant 0 : index
    %10 = vector.load %arg4[%c0_6, %c0_7] : memref<64x64xbf16, #tpu.memory_space<vmem>>, vector<64x64xbf16>
    %cst_8 = arith.constant dense<0.000000e+00> : vector<16x64xf32>
    %11 = tpu.matmul %9, %10, %cst_8 {dimension_numbers = #tpu.dot_dimension_numbers<[1], [0], [0], [1], [0, 0, 1, 1], [], []>} : vector<16x64xbf16>, vector<64x64xbf16>, vector<16x64xf32> -> vector<16x64xf32>
    %c0_9 = arith.constant 0 : index
    %c0_10 = arith.constant 0 : index
    %12 = vector.load %arg5[%c0_9, %c0_10] : memref<1x64xf32, #tpu.memory_space<vmem>>, vector<1x64xf32>
    %13 = vector.broadcast %12 : vector<1x64xf32> to vector<16x64xf32>
    %14 = arith.addf %11, %13 : vector<16x64xf32>
    %cst_11 = arith.constant 0.000000e+00 : f32
    %15 = vector.broadcast %cst_11 : f32 to vector<16x64xf32>
    %16 = arith.maximumf %14, %15 : vector<16x64xf32>
    %c0_12 = arith.constant 0 : index
    %c0_13 = arith.constant 0 : index
    %17 = vector.load %arg6[%c0_12, %c0_13] : memref<1x64xbf16, #tpu.memory_space<vmem>>, vector<1x64xbf16>
    %18 = arith.truncf %16 : vector<16x64xf32> to vector<16x64xbf16>
    %cst_14 = arith.constant dense<0.000000e+00> : vector<1x16xf32>
    %19 = tpu.matmul %17, %18, %cst_14 {dimension_numbers = #tpu.dot_dimension_numbers<[1], [1], [0], [0], [0, 0, 1, 0], [], []>} : vector<1x64xbf16>, vector<16x64xbf16>, vector<1x16xf32> -> vector<1x16xf32>
    %c0_15 = arith.constant 0 : index
    %c0_16 = arith.constant 0 : index
    %20 = vector.load %arg7[%c0_15, %c0_16] : memref<1x1xf32, #tpu.memory_space<vmem>>, vector<1x1xf32>
    %21 = vector.broadcast %20 : vector<1x1xf32> to vector<1x16xf32>
    %22 = arith.addf %19, %21 : vector<1x16xf32>
    %c0_17 = arith.constant 0 : index
    %c0_18 = arith.constant 0 : index
    %23 = vector.load %arg8[%c0_17, %c0_18] : memref<1x16xf32, #tpu.memory_space<vmem>>, vector<1x16xf32>
    tpu.vector_store %arg8[%c0_17, %c0_18], %22 {strides = array<i32>} : memref<1x16xf32, #tpu.memory_space<vmem>>, vector<1x16xf32>,
    return
  }
  func.func @transform_0(%arg0: i32) -> (i32, i32) {
    %c0_i32 = arith.constant 0 : i32
    %c0_i32_0 = arith.constant 0 : i32
    return %arg0, %c0_i32 : i32, i32
  }
  func.func @transform_1(%arg0: i32) -> (i32, i32) {
    %c0_i32 = arith.constant 0 : i32
    %c0_i32_0 = arith.constant 0 : i32
    %c0_i32_1 = arith.constant 0 : i32
    return %c0_i32, %c0_i32_0 : i32, i32
  }
  func.func @transform_2(%arg0: i32) -> (i32, i32) {
    %c0_i32 = arith.constant 0 : i32
    %c0_i32_0 = arith.constant 0 : i32
    %c0_i32_1 = arith.constant 0 : i32
    return %c0_i32, %c0_i32_0 : i32, i32
  }
  func.func @transform_3(%arg0: i32) -> (i32, i32) {
    %c0_i32 = arith.constant 0 : i32
    %c0_i32_0 = arith.constant 0 : i32
    %c0_i32_1 = arith.constant 0 : i32
    return %c0_i32, %c0_i32_0 : i32, i32
  }
  func.func @transform_4(%arg0: i32) -> (i32, i32) {
    %c0_i32 = arith.constant 0 : i32
    %c0_i32_0 = arith.constant 0 : i32
    %c0_i32_1 = arith.constant 0 : i32
    return %c0_i32, %c0_i32_0 : i32, i32
  }
  func.func @transform_5(%arg0: i32) -> (i32, i32) {
    %c0_i32 = arith.constant 0 : i32
    %c0_i32_0 = arith.constant 0 : i32
    %c0_i32_1 = arith.constant 0 : i32
    return %c0_i32, %c0_i32_0 : i32, i32
  }
  func.func @transform_6(%arg0: i32) -> (i32, i32) {
    %c0_i32 = arith.constant 0 : i32
    %c0_i32_0 = arith.constant 0 : i32
    %c0_i32_1 = arith.constant 0 : i32
    return %c0_i32, %c0_i32_0 : i32, i32
  }
  func.func @transform_7(%arg0: i32) -> (i32, i32) {
    %c0_i32 = arith.constant 0 : i32
    %c0_i32_0 = arith.constant 0 : i32
    return %c0_i32, %arg0 : i32, i32
  }
}

</mosaic_0001>

<llo_original>
// kernel: tpu_custom_call.1
$region0: #{tpu_custom_call.1}
  #allocation0 [shape = 'u32[]', space=smem, size = 0x4, offset = 0x4, fixed_abs, tag = 'smem constant byte address 0x4 - core index']
  #allocation1 [shape = 'u32[144,128]{1,0:T(1,128)}', space=vmem, size = 0x12000, scoped, tag = 'internal scratch']
  #allocation2 [shape = 'f32[1,1]{1,0:T(1,128)S(1)}', space=vmem, size = 0x200, scoped, tag = 'scoped memory for tpu_custom_call.1']
  %s0 = inlined_call_operand.hbm [shape: f32[16,32], index: 0, kind: input, shape index: {}]
  %s1 = inlined_call_operand.hbm [shape: bf16[32,64], index: 1, kind: input, shape index: {}]
  %s2 = inlined_call_operand.vmem [shape: f32[1,64], index: 2, kind: input, shape index: {}]
  %s3 = inlined_call_operand.hbm [shape: bf16[64,64], index: 3, kind: input, shape index: {}]
  %s4 = inlined_call_operand.vmem [shape: f32[1,64], index: 4, kind: input, shape index: {}]
  %s5 = inlined_call_operand.vmem [shape: bf16[1,64], index: 5, kind: input, shape index: {}]
  %s6 = inlined_call_operand.<no memory space> [shape: f32[1,1], index: 6, kind: input, shape index: {}]
  %s7 = inlined_call_operand.hbm [shape: f32[1,16], index: 7, kind: output, shape index: {}]
  %s8 = sld [smem:[#allocation0]]
  $region50: #{tpu_custom_call.1} parent=0
    _
  %s10 = ssub.s32 1, %s8
  %s11 = scalar_select 0, %s10, %s8
  %v12 = vstv %s6
  %13 = vst [vmem:[#allocation2] sm:$0x1] %v12
  $region1: #{tpu_custom_call.1} parent=0
    #allocation3 [shape = 'u8[8192]{0}', space=vmem, size = 0x2000, scoped, tag = 'input window, operand 0, single buffered']
    #allocation4 [shape = 's32[1]{0}', space=sflag, size = 0x4, scoped, tag = 'scoped memory for tpu_custom_call.1']
    #allocation5 [shape = 's32[1]{0}', space=sflag, size = 0x4, scoped, tag = 'scoped memory for tpu_custom_call.1']
    #allocation6 [shape = 'u8[8192]{0}', space=vmem, size = 0x2000, scoped, tag = 'input window, operand 1, single buffered']
    #allocation7 [shape = 's32[1]{0}', space=sflag, size = 0x4, scoped, tag = 'scoped memory for tpu_custom_call.1']
    #allocation8 [shape = 'u8[16384]{0}', space=vmem, size = 0x4000, scoped, tag = 'input window, operand 3, single buffered']
    #allocation9 [shape = 'u8[512]{0}', space=vmem, size = 0x400, scoped, tag = 'output window, operand 0, single buffered']
    %14 = vsyncpa [#allocation4], 0
    %15 = vsyncpa [#allocation7], 0
    %16 = vsyncpa [#allocation5], 0
    // Predicated region
    $region2: #{tpu_custom_call.1} parent=1 // pred_check
      _
    $region3: #{tpu_custom_call.1} parent=1 // pred_check_branch
      %18 = sbr.rel (0) target = $region5
    $region4: #{tpu_custom_call.1} parent=1 // pred_region
      %s20 = ssub.s32 256, 256
      %21 = vsyncadd [#allocation4], %s20
      %s22 = sshll.u32 [#allocation3], 4
      %s23 = int_to_ptr.vmem [resolvable:$true] %s22
      %28 = dma.hbm_to_vmem [thread:$0]  %s0, 256, %s23, [#allocation4], 128, 128, 8
    $region5: #{tpu_custom_call.1} parent=1 // pred_fallthru
      _
    // Predicated region
    $region6: #{tpu_custom_call.1} parent=1 // pred_check
      _
    $region7: #{tpu_custom_call.1} parent=1 // pred_check_branch
      %30 = sbr.rel (0) target = $region9
    $region8: #{tpu_custom_call.1} parent=1 // pred_region
      %s32 = ssub.s32 256, 256
      %33 = vsyncadd [#allocation7], %s32
      %s34 = sshll.u32 [#allocation6], 4
      %s35 = int_to_ptr.vmem [resolvable:$true] %s34
      %40 = dma.hbm_to_vmem [thread:$0]  %s1, 256, %s35, [#allocation7], 64, 64, 4
    $region9: #{tpu_custom_call.1} parent=1 // pred_fallthru
      _
    // Predicated region
    $region10: #{tpu_custom_call.1} parent=1 // pred_check
      _
    $region11: #{tpu_custom_call.1} parent=1 // pred_check_branch
      %42 = sbr.rel (0) target = $region13
    $region12: #{tpu_custom_call.1} parent=1 // pred_region
      _
    $region13: #{tpu_custom_call.1} parent=1 // pred_fallthru
      _
    // Predicated region
    $region14: #{tpu_custom_call.1} parent=1 // pred_check
      _
    $region15: #{tpu_custom_call.1} parent=1 // pred_check_branch
      %44 = sbr.rel (0) target = $region17
    $region16: #{tpu_custom_call.1} parent=1 // pred_region
      %s46 = ssub.s32 512, 512
      %47 = vsyncadd [#allocation7], %s46
      %s48 = sshll.u32 [#allocation8], 4
      %s49 = int_to_ptr.vmem [resolvable:$true] %s48
      %54 = dma.hbm_to_vmem [thread:$0]  %s3, 512, %s49, [#allocation7], 64, 64, 4
    $region17: #{tpu_custom_call.1} parent=1 // pred_fallthru
      _
    // Predicated region
    $region18: #{tpu_custom_call.1} parent=1 // pred_check
      _
    $region19: #{tpu_custom_call.1} parent=1 // pred_check_branch
      %56 = sbr.rel (0) target = $region21
    $region20: #{tpu_custom_call.1} parent=1 // pred_region
      _
    $region21: #{tpu_custom_call.1} parent=1 // pred_fallthru
      _
    // Predicated region
    $region22: #{tpu_custom_call.1} parent=1 // pred_check
      _
    $region23: #{tpu_custom_call.1} parent=1 // pred_check_branch
      %58 = sbr.rel (0) target = $region25
    $region24: #{tpu_custom_call.1} parent=1 // pred_region
      _
    $region25: #{tpu_custom_call.1} parent=1 // pred_fallthru
      _
    // Predicated region
    $region26: #{tpu_custom_call.1} parent=1 // pred_check
      _
    $region27: #{tpu_custom_call.1} parent=1 // pred_check_branch
      %60 = sbr.rel (0) target = $region29
    $region28: #{tpu_custom_call.1} parent=1 // pred_region
      _
    $region29: #{tpu_custom_call.1} parent=1 // pred_fallthru
      _
    // Predicated region
    $region30: #{tpu_custom_call.1} parent=1 // pred_check
      _
    $region31: #{tpu_custom_call.1} parent=1 // pred_check_branch
      %62 = sbr.rel (0) target = $region33
    $region32: #{tpu_custom_call.1} parent=1 // pred_region
      %63 = dma.done [#allocation4], 256
    $region33: #{tpu_custom_call.1} parent=1 // pred_fallthru
      _
    // Predicated region
    $region34: #{tpu_custom_call.1} parent=1 // pred_check
      _
    $region35: #{tpu_custom_call.1} parent=1 // pred_check_branch
      %65 = sbr.rel (0) target = $region37
    $region36: #{tpu_custom_call.1} parent=1 // pred_region
      %66 = dma.done [#allocation7], 256
    $region37: #{tpu_custom_call.1} parent=1 // pred_fallthru
      _
    // Predicated region
    $region38: #{tpu_custom_call.1} parent=1 // pred_check
      _
    $region39: #{tpu_custom_call.1} parent=1 // pred_check_branch
      %68 = sbr.rel (0) target = $region41
    $region40: #{tpu_custom_call.1} parent=1 // pred_region
      %69 = dma.done [#allocation7], 512
    $region41: #{tpu_custom_call.1} parent=1 // pred_fallthru
      _
    %v71 = vld [vmem:[#allocation3] sm:$0xff]
    %v72 = vld [vmem:[#allocation3 + $0x8] sm:$0xff]
    %v73 = vpack.c.bf16 %v72, %v71
    %v74 = vld [vmem:[#allocation6] sm:$0xf]
    %v75 = vld [vmem:[#allocation6 + $0x4] sm:$0xf]
    %v76 = vld [vmem:[#allocation6 + $0x8] sm:$0xf]
    %v77 = vld [vmem:[#allocation6 + $0xc] sm:$0xf]
    %v78 = vld [vmem:[%s2] sm:$0x1]
    %v80 = vlaneseq
    %v81 = vshrl.u32 %v80, 7
    %v82 = vsub.s32 0, %v81
    %v83 = vrot.slane %v78, %v82
    %v89 = vunpack.c.l.b16 %v74
    %v90 = vunpack.c.l.b16 %v75
    %v91 = vunpack.c.l.b16 %v76
    %v92 = vunpack.c.l.b16 %v77
    %v93 = vpack.c.b16 %v90, %v89
    %v94 = vpack.c.b16 %v92, %v91
    %vm97 = vcmask 261120
    %v99 = vsel %vm97, %v73, 0
    %101 = vmatprep.subr.bf16.mxu0 0
    %102 = vmatpush1.bf16.msra.mxu0 0
    %103 = vmatprep.subr.bf16.mxu0 0
    %104 = vmatpush1.bf16.msra.mxu0 0
    %105 = vmatprep.subr.bf16.mxu0 0
    %106 = vmatpush1.bf16.msra.mxu0 0
    %107 = vmatprep.subr.bf16.mxu0 0
    %108 = vmatpush1.bf16.msra.mxu0 0
    %109 = vmatprep.subr.bf16.mxu0 0
    %110 = vmatpush1.bf16.msra.mxu0 0
    %111 = vmatprep.subr.bf16.mxu0 0
    %112 = vmatpush1.bf16.msra.mxu0 0
    %113 = vmatprep.subr.bf16.mxu0 0
    %114 = vmatpush1.bf16.msra.mxu0 %v94
    %115 = vmatprep.subr.bf16.mxu0 0
    %116 = vmatpush1.bf16.msra.mxu0 %v93
    %117 = vmatprep.subr.bf16.mxu0 0
    %118 = vmatpush2.bf16.msra.mxu0 0
    %119 = vmatprep.subr.bf16.mxu0 0
    %120 = vmatpush2.bf16.msra.mxu0 0
    %121 = vmatprep.subr.bf16.mxu0 0
    %122 = vmatpush2.bf16.msra.mxu0 0
    %123 = vmatprep.subr.bf16.mxu0 0
    %124 = vmatpush2.bf16.msra.mxu0 0
    %125 = vmatprep.subr.bf16.mxu0 0
    %126 = vmatpush2.bf16.msra.mxu0 0
    %127 = vmatprep.subr.bf16.mxu0 0
    %128 = vmatpush2.bf16.msra.mxu0 0
    %129 = vmatprep.subr.bf16.mxu0 0
    %130 = vmatpush2.bf16.msra.mxu0 0
    %131 = vmatprep.subr.bf16.mxu0 0
    %132 = vmatpush2.bf16.msra.mxu0 0
    %133 = vmatprep.mubr.bf16.mxu0 0
    %134 = vmatmul.mubr.bf16.gmra.mxu0 %v99
    %v135 = vpop.f32.mrf.mxu0
    %v136 = vadd.f32 %v83, %v135
    %v137 = vpop.f32.mrf.mxu0
    %v138 = vpop.f32.mrf.mxu0
    %v139 = vadd.f32 %v83, %v138
    %v140 = vpop.f32.mrf.mxu0
    %141 = vdwg.mxu0
    %v142 = vmax.f32 %v136, 0.0
    %v143 = vmax.f32 %v139, 0.0
    %v144 = vpack.c.bf16 %v143, %v142
    %v145 = vld [vmem:[#allocation8] sm:$0xf]
    %v146 = vld [vmem:[#allocation8 + $0x4] sm:$0xf]
    %v147 = vld [vmem:[#allocation8 + $0x8] sm:$0xf]
    %v148 = vld [vmem:[#allocation8 + $0xc] sm:$0xf]
    %v149 = vld [vmem:[#allocation8 + $0x10] sm:$0xf]
    %v150 = vld [vmem:[#allocation8 + $0x14] sm:$0xf]
    %v151 = vld [vmem:[#allocation8 + $0x18] sm:$0xf]
    %v152 = vld [vmem:[#allocation8 + $0x1c] sm:$0xf]
    %v153 = vld [vmem:[%s4] sm:$0x1]
    %v155 = vlaneseq
    %v156 = vshrl.u32 %v155, 7
    %v157 = vsub.s32 0, %v156
    %v158 = vrot.slane %v153, %v157
    %v168 = vunpack.c.l.b16 %v145
    %v169 = vunpack.c.l.b16 %v146
    %v170 = vunpack.c.l.b16 %v147
    %v171 = vunpack.c.l.b16 %v148
    %v172 = vunpack.c.l.b16 %v149
    %v173 = vunpack.c.l.b16 %v150
    %v174 = vunpack.c.l.b16 %v151
    %v175 = vunpack.c.l.b16 %v152
    %v176 = vpack.c.b16 %v169, %v168
    %v177 = vpack.c.b16 %v171, %v170
    %v178 = vpack.c.b16 %v173, %v172
    %v179 = vpack.c.b16 %v175, %v174
    %vm184 = vcmask 523264
    %v186 = vsel %vm184, %v144, 0
    %188 = vmatprep.subr.bf16.mxu0 0
    %189 = vmatpush1.bf16.msra.mxu0 0
    %190 = vmatprep.subr.bf16.mxu0 0
    %191 = vmatpush1.bf16.msra.mxu0 0
    %192 = vmatprep.subr.bf16.mxu0 0
    %193 = vmatpush1.bf16.msra.mxu0 0
    %194 = vmatprep.subr.bf16.mxu0 0
    %195 = vmatpush1.bf16.msra.mxu0 0
    %196 = vmatprep.subr.bf16.mxu0 0
    %197 = vmatpush1.bf16.msra.mxu0 %v179
    %198 = vmatprep.subr.bf16.mxu0 0
    %199 = vmatpush1.bf16.msra.mxu0 %v178
    %200 = vmatprep.subr.bf16.mxu0 0
    %201 = vmatpush1.bf16.msra.mxu0 %v177
    %202 = vmatprep.subr.bf16.mxu0 0
    %203 = vmatpush1.bf16.msra.mxu0 %v176
    %204 = vmatprep.subr.bf16.mxu0 0
    %205 = vmatpush2.bf16.msra.mxu0 0
    %206 = vmatprep.subr.bf16.mxu0 0
    %207 = vmatpush2.bf16.msra.mxu0 0
    %208 = vmatprep.subr.bf16.mxu0 0
    %209 = vmatpush2.bf16.msra.mxu0 0
    %210 = vmatprep.subr.bf16.mxu0 0
    %211 = vmatpush2.bf16.msra.mxu0 0
    %212 = vmatprep.subr.bf16.mxu0 0
    %213 = vmatpush2.bf16.msra.mxu0 0
    %214 = vmatprep.subr.bf16.mxu0 0
    %215 = vmatpush2.bf16.msra.mxu0 0
    %216 = vmatprep.subr.bf16.mxu0 0
    %217 = vmatpush2.bf16.msra.mxu0 0
    %218 = vmatprep.subr.bf16.mxu0 0
    %219 = vmatpush2.bf16.msra.mxu0 0
    %220 = vmatprep.mubr.bf16.mxu0 0
    %221 = vmatmul.mubr.bf16.gmra.mxu0 %v186
    %v222 = vpop.f32.mrf.mxu0
    %v223 = vadd.f32 %v158, %v222
    %v224 = vpop.f32.mrf.mxu0
    %v225 = vpop.f32.mrf.mxu0
    %v226 = vadd.f32 %v158, %v225
    %v227 = vpop.f32.mrf.mxu0
    %228 = vdwg.mxu0
    %v229 = vmax.f32 %v223, 0.0
    %v230 = vmax.f32 %v226, 0.0
    %v231 = vld [vmem:[%s5] sm:$0x1]
    %v232 = vpack.c.bf16 %v230, %v229
    %v233 = vld [vmem:[#allocation2] sm:$0x1]
    %235 = vset.pattern.permute.xlu0 0
    %236 = vperm.xlu0 %235, %v233
    %v237 = vpop.permute.xlu0 %236
    %v239 = vlaneseq
    %v240 = vshrl.u32 %v239, 7
    %v241 = vsub.s32 0, %v240
    %v242 = vrot.slane %v237, %v241
    %v244 = vsel %vm184, %v231, 0
    %v247 = vsel %vm184, %v232, 0
    %249 = vmatprep.subr.bf16.mxu0 0
    %250 = vmatpush1.bf16.xpose.msra.mxu0 0
    %251 = vmatprep.subr.bf16.mxu0 0
    %252 = vmatpush1.bf16.xpose.msra.mxu0 0
    %253 = vmatprep.subr.bf16.mxu0 0
    %254 = vmatpush1.bf16.xpose.msra.mxu0 0
    %255 = vmatprep.subr.bf16.mxu0 0
    %256 = vmatpush1.bf16.xpose.msra.mxu0 0
    %257 = vmatprep.subr.bf16.mxu0 0
    %258 = vmatpush1.bf16.xpose.msra.mxu0 0
    %259 = vmatprep.subr.bf16.mxu0 0
    %260 = vmatpush1.bf16.xpose.msra.mxu0 0
    %261 = vmatprep.subr.bf16.mxu0 0
    %262 = vmatpush1.bf16.xpose.msra.mxu0 0
    %263 = vmatprep.subr.bf16.mxu0 0
    %264 = vmatpush1.bf16.xpose.msra.mxu0 %v247
    %265 = vmatprep.subr.bf16.mxu0 0
    %266 = vmatpush2.bf16.xpose.msra.mxu0 0
    %267 = vmatprep.subr.bf16.mxu0 0
    %268 = vmatpush2.bf16.xpose.msra.mxu0 0
    %269 = vmatprep.subr.bf16.mxu0 0
    %270 = vmatpush2.bf16.xpose.msra.mxu0 0
    %271 = vmatprep.subr.bf16.mxu0 0
    %272 = vmatpush2.bf16.xpose.msra.mxu0 0
    %273 = vmatprep.subr.bf16.mxu0 0
    %274 = vmatpush2.bf16.xpose.msra.mxu0 0
    %275 = vmatprep.subr.bf16.mxu0 0
    %276 = vmatpush2.bf16.xpose.msra.mxu0 0
    %277 = vmatprep.subr.bf16.mxu0 0
    %278 = vmatpush2.bf16.xpose.msra.mxu0 0
    %279 = vmatprep.subr.bf16.mxu0 0
    %280 = vmatpush2.bf16.xpose.msra.mxu0 0
    %281 = vmatprep.mubr.bf16.mxu0 0
    %282 = vmatmul.mubr.bf16.gmra.mxu0 %v244
    %v283 = vpop.f32.mrf.mxu0
    %v284 = vadd.f32 %v242, %v283
    %v285 = vpop.f32.mrf.mxu0
    %v286 = vpop.f32.mrf.mxu0
    %v287 = vpop.f32.mrf.mxu0
    %288 = vdwg.mxu0
    %vm289 = vcmask 122880
    %290 = vst.msk [vmem:[#allocation9] sm:$0x1] %vm289, %v284
    // Predicated region
    $region42: #{tpu_custom_call.1} parent=1 // pred_check
      _
    $region43: #{tpu_custom_call.1} parent=1 // pred_check_branch
      %292 = sbr.rel (0) target = $region45
    $region44: #{tpu_custom_call.1} parent=1 // pred_region
      %s294 = ssub.s32 16, 16
      %295 = vsyncadd [#allocation5], %s294
      %s297 = sshll.u32 [#allocation9], 4
      %s298 = int_to_ptr.vmem [resolvable:$true] %s297
      %300 = dma.vmem_to_hbm [thread:$0]  %s298, 16, %s7, [#allocation5]
    $region45: #{tpu_custom_call.1} parent=1 // pred_fallthru
      _
    // Predicated region
    $region46: #{tpu_custom_call.1} parent=1 // pred_check
      _
    $region47: #{tpu_custom_call.1} parent=1 // pred_check_branch
      %302 = sbr.rel (0) target = $region49
    $region48: #{tpu_custom_call.1} parent=1 // pred_region
      %303 = dma.done [#allocation5], 16
    $region49: #{tpu_custom_call.1} parent=1 // pred_fallthru
      _
    %304 = vsyncpa [#allocation4], 1
    %305 = vsyncpa [#allocation7], 1
    %306 = vsyncpa [#allocation5], 1

</llo_original>
